<compile_context>
chip_gen: v5e
topology: v5e:2x2
jax: 0.10.0
libtpu: 0.0.40
codegen_flags: <defaults>
</compile_context>

<pallas_src>
import functools
import math

import jax
import jax.numpy as jnp
from jax.experimental import pallas as pl
from jax.experimental.pallas import tpu as pltpu


def _label_smoothing_kernel(x_ref, tgt_ref, o_ref, *, n_rows, padding_idx,
                            base, confidence, c_row):
    i = pl.program_id(0)
    x = x_ref[...].astype(jnp.float32)        # (tn, V) log-probs
    tgt = tgt_ref[...]                        # (tn, 1) int32 class ids
    tn = tgt.shape[0]

    # Row validity: rows past N (partial edge block) and rows whose target is
    # the padding index contribute exactly 0 (matches index_fill_ masking).
    row = jax.lax.broadcasted_iota(jnp.int32, (tn, 1), 0) + i * tn
    row_ok = row < n_rows                                    # (tn, 1) bool
    valid = row_ok & (tgt != padding_idx)                    # (tn, 1) bool

    # true_dist: fill base, scatter confidence at target col, zero the padding
    # column, zero invalid rows.  log(td) values are folded into c_row.
    col = jax.lax.broadcasted_iota(jnp.int32, x.shape, 1)    # class idx per lane
    td = jnp.full(x.shape, jnp.float32(base))
    td = jnp.where(col == tgt, jnp.float32(confidence), td)
    td = jnp.where(col == padding_idx, jnp.float32(0.0), td)
    td = jnp.where(valid, td, jnp.float32(0.0))

    # Mask x so NaN/Inf garbage in the unread tail of a partial block cannot
    # poison the sum through 0 * inf.
    xm = jnp.where(row_ok, x, jnp.float32(0.0))

    # KLDiv(sum) over this tile = sum td*log(td) - sum td*x
    #                           = n_valid * c_row - sum(td * x)
    n_valid = jnp.sum(valid.astype(jnp.float32))
    cross = jnp.sum(td * xm)
    partial = n_valid * jnp.float32(c_row) - cross

    # Scalar partial goes to element [0,0,0] of this program's own lane-dense
    # (1, 8, 128) output block (disjoint blocks -> "parallel" safe).
    sub = jax.lax.broadcasted_iota(jnp.int32, o_ref.shape, 1)
    lane = jax.lax.broadcasted_iota(jnp.int32, o_ref.shape, 2)
    o_ref[...] = jnp.where((sub == 0) & (lane == 0), partial, jnp.float32(0.0))


def label_smoothing_loss(x, target, *, size, padding_idx, smoothing=0.0,
                         tn=None):
    """x: [N, V] float log-probs, target: [N] int class ids. Returns scalar KLDiv(sum)."""
    N, V = x.shape
    assert V == size
    assert size > 2, "smoothing/(size-2) is undefined for size <= 2"
    confidence = 1.0 - smoothing
    base = smoothing / (size - 2)

    # Trace-time constant: per-valid-row sum of td*log(td), with xlogy(0)=0.
    c_row = 0.0
    if base > 0.0:
        c_row += (size - 2) * base * math.log(base)
    if confidence > 0.0:
        c_row += confidence * math.log(confidence)

    # Largest row tile whose double-buffered, lane-padded x block stays well
    # inside the scoped VMEM limit on every generation (incl. v7x 64 MiB).
    if tn is None:
        itemsize = jnp.dtype(x.dtype).itemsize
        row_bytes = max(V, 128) * itemsize            # lane-padded VMEM per row
        tn = (8 * 1024 * 1024) // row_bytes           # 8 MiB per x buffer
        tn = max(8, min(8192, (tn // 8) * 8))
    tn = min(tn, ((N + 7) // 8) * 8)                  # don't tile past N
    assert tn % 8 == 0 and tn >= 8

    G = pl.cdiv(N, tn)                                # partial edge block OK
    tgt2d = target.astype(jnp.int32).reshape(N, 1)

    kernel = functools.partial(
        _label_smoothing_kernel,
        n_rows=N, padding_idx=padding_idx, base=base,
        confidence=confidence, c_row=c_row)

    partials = pl.pallas_call(
        kernel,
        out_shape=jax.ShapeDtypeStruct((G, 8, 128), jnp.float32),
        grid_spec=pltpu.PrefetchScalarGridSpec(
            num_scalar_prefetch=0,
            grid=(G,),
            in_specs=[
                pl.BlockSpec((tn, V), lambda i: (i, 0)),
                pl.BlockSpec((tn, 1), lambda i: (i, 0)),
            ],
            out_specs=pl.BlockSpec((1, 8, 128), lambda i: (i, 0, 0)),
        ),
        compiler_params=pltpu.CompilerParams(
            dimension_semantics=("parallel",),          # megacore-shardable
            vmem_limit_bytes=32 * 1024 * 1024),
    )(x, tgt2d)
    return jnp.sum(partials)


def _reference(x, target, *, size, padding_idx, smoothing):
    # Pure-JAX reference mirroring the PyTorch forward (KLDivLoss 'sum').
    confidence = 1.0 - smoothing
    N, V = x.shape
    col = jnp.arange(V)[None, :]
    tgt = target[:, None]
    td = jnp.full((N, V), smoothing / (size - 2), jnp.float32)
    td = jnp.where(col == tgt, confidence, td)
    td = td.at[:, padding_idx].set(0.0)
    td = jnp.where(tgt == padding_idx, 0.0, td)
    loss = jnp.where(td > 0, td * (jnp.log(jnp.where(td > 0, td, 1.0)) - x), 0.0)
    return jnp.sum(loss)


if __name__ == "__main__":
    # Module "parameters" (deterministic, from __init__ signature).
    size = 32          # vocab size (x.size(1))
    padding_idx = 0
    smoothing = 0.1

    N = 16             # number of rows (e.g. batch=2 * seq=8)

    key = jax.random.PRNGKey(0)
    kx, kt = jax.random.split(key)
    logits = jax.random.normal(kx, (N, size), dtype=jnp.float32)
    x = jax.nn.log_softmax(logits, axis=-1)       # log-prob input, like KLDivLoss expects
    target = jax.random.randint(kt, (N,), 0, size, dtype=jnp.int32)
    target = target.at[3].set(padding_idx)        # exercise the padding-row masking

    loss = label_smoothing_loss(x, target, size=size,
                                padding_idx=padding_idx, smoothing=smoothing)
    loss = jax.block_until_ready(loss)
    ref = _reference(x, target, size=size, padding_idx=padding_idx,
                     smoothing=smoothing)
    assert jnp.allclose(loss, ref, rtol=1e-5, atol=1e-4), (loss, ref)

    # Ragged-N path: no input padding — partial edge block is masked in-kernel.
    N2 = 13
    x2 = x[:N2]
    t2 = target[:N2]
    loss2 = jax.block_until_ready(
        label_smoothing_loss(x2, t2, size=size, padding_idx=padding_idx,
                             smoothing=smoothing))
    ref2 = _reference(x2, t2, size=size, padding_idx=padding_idx,
                      smoothing=smoothing)
    assert jnp.allclose(loss2, ref2, rtol=1e-5, atol=1e-4), (loss2, ref2)

    # Small-tile path (forces multiple grid steps + partial last block).
    loss3 = jax.block_until_ready(
        label_smoothing_loss(x2, t2, size=size, padding_idx=padding_idx,
                             smoothing=smoothing, tn=8))
    assert jnp.allclose(loss3, ref2, rtol=1e-5, atol=1e-4), (loss3, ref2)

    print("KERNEL_OK")
</pallas_src>

<mosaic_0001>
module attributes {stable_mosaic.version = 11 : i64} {
  func.func @_label_smoothing_kernel(%arg0: i32, %arg1: memref<16x32xf32, #tpu.memory_space<vmem>>, %arg2: memref<16x1xi32, #tpu.memory_space<vmem>>, %arg3: memref<1x8x128xf32, #tpu.memory_space<vmem>>) attributes {dimension_semantics = [#tpu.dimension_semantics<parallel>], iteration_bounds = array<i64: 1>, scalar_prefetch = 0 : i64, scratch_operands = 0 : i64, tpu.core_type = #tpu.core_type<tc>, window_params = [{transform_indices = @transform_0, window_bounds = array<i64: 16, 32>}, {transform_indices = @transform_1, window_bounds = array<i64: 16, 1>}, {transform_indices = @transform_2, window_bounds = array<i64: 1, 8, 128>}]} {
    %c0 = arith.constant 0 : index
    %c0_0 = arith.constant 0 : index
    %0 = vector.load %arg1[%c0, %c0_0] : memref<16x32xf32, #tpu.memory_space<vmem>>, vector<16x32xf32>
    %c0_1 = arith.constant 0 : index
    %c0_2 = arith.constant 0 : index
    %1 = vector.load %arg2[%c0_1, %c0_2] : memref<16x1xi32, #tpu.memory_space<vmem>>, vector<16x1xi32>
    %2 = tpu.iota {dimensions = array<i32: 0>} : vector<16x1xi32>
    %c16_i32 = arith.constant 16 : i32
    %3 = arith.muli %arg0, %c16_i32 : i32
    %4 = vector.broadcast %3 : i32 to vector<16x1xi32>
    %5 = arith.addi %2, %4 : vector<16x1xi32>
    %c16_i32_3 = arith.constant 16 : i32
    %6 = vector.broadcast %c16_i32_3 : i32 to vector<16x1xi32>
    %7 = arith.cmpi slt, %5, %6 : vector<16x1xi32>
    %c0_i32 = arith.constant 0 : i32
    %8 = vector.broadcast %c0_i32 : i32 to vector<16x1xi32>
    %9 = arith.cmpi ne, %1, %8 : vector<16x1xi32>
    %10 = arith.andi %7, %9 : vector<16x1xi1>
    %11 = tpu.iota {dimensions = array<i32: 1>} : vector<16x32xi32>
    %cst = arith.constant 0.00333333341 : f32
    %12 = vector.broadcast %cst : f32 to vector<16x32xf32>
    %13 = vector.broadcast %1 : vector<16x1xi32> to vector<16x32xi32>
    %14 = arith.cmpi eq, %11, %13 : vector<16x32xi32>
    %cst_4 = arith.constant 0.899999976 : f32
    %15 = vector.broadcast %cst_4 : f32 to vector<16x32xf32>
    %16 = arith.select %14, %15, %12 : vector<16x32xi1>, vector<16x32xf32>
    %c0_i32_5 = arith.constant 0 : i32
    %17 = vector.broadcast %c0_i32_5 : i32 to vector<16x32xi32>
    %18 = arith.cmpi eq, %11, %17 : vector<16x32xi32>
    %cst_6 = arith.constant 0.000000e+00 : f32
    %19 = vector.broadcast %cst_6 : f32 to vector<16x32xf32>
    %20 = arith.select %18, %19, %16 : vector<16x32xi1>, vector<16x32xf32>
    %cst_7 = arith.constant 0.000000e+00 : f32
    %21 = vector.shape_cast %10 : vector<16x1xi1> to vector<16x1xi1>
    %22 = vector.broadcast %21 : vector<16x1xi1> to vector<16x32xi1>
    %23 = vector.broadcast %cst_7 : f32 to vector<16x32xf32>
    %24 = arith.select %22, %20, %23 : vector<16x32xi1>, vector<16x32xf32>
    %cst_8 = arith.constant 0.000000e+00 : f32
    %25 = vector.shape_cast %7 : vector<16x1xi1> to vector<16x1xi1>
    %26 = vector.broadcast %25 : vector<16x1xi1> to vector<16x32xi1>
    %27 = vector.broadcast %cst_8 : f32 to vector<16x32xf32>
    %28 = arith.select %26, %0, %27 : vector<16x32xi1>, vector<16x32xf32>
    %29 = arith.extui %10 : vector<16x1xi1> to vector<16x1xi32>
    %30 = arith.sitofp %29 : vector<16x1xi32> to vector<16x1xf32>
    %31 = vector.shape_cast %30 : vector<16x1xf32> to vector<1x16x1xf32>
    %cst_9 = arith.constant dense<0.000000e+00> : vector<1xf32>
    %32 = vector.multi_reduction <add>, %31, %cst_9 [1, 2] : vector<1x16x1xf32> to vector<1xf32>
    %33 = vector.shape_cast %32 : vector<1xf32> to vector<1x1x1xf32>
    %34 = vector.extract %33[0, 0, 0] : f32 from vector<1x1x1xf32>
    %35 = arith.mulf %24, %28 : vector<16x32xf32>
    %36 = vector.shape_cast %35 : vector<16x32xf32> to vector<1x16x32xf32>
    %cst_10 = arith.constant dense<0.000000e+00> : vector<1xf32>
    %37 = vector.multi_reduction <add>, %36, %cst_10 [1, 2] : vector<1x16x32xf32> to vector<1xf32>
    %38 = vector.shape_cast %37 : vector<1xf32> to vector<1x1x1xf32>
    %39 = vector.extract %38[0, 0, 0] : f32 from vector<1x1x1xf32>
    %cst_11 = arith.constant -0.665202737 : f32
    %40 = arith.mulf %34, %cst_11 : f32
    %41 = arith.subf %40, %39 : f32
    %42 = tpu.iota {dimensions = array<i32: 1>} : vector<1x8x128xi32>
    %43 = tpu.iota {dimensions = array<i32: 2>} : vector<1x8x128xi32>
    %c0_i32_12 = arith.constant 0 : i32
    %44 = vector.broadcast %c0_i32_12 : i32 to vector<1x8x128xi32>
    %45 = arith.cmpi eq, %42, %44 : vector<1x8x128xi32>
    %c0_i32_13 = arith.constant 0 : i32
    %46 = vector.broadcast %c0_i32_13 : i32 to vector<1x8x128xi32>
    %47 = arith.cmpi eq, %43, %46 : vector<1x8x128xi32>
    %48 = arith.andi %45, %47 : vector<1x8x128xi1>
    %cst_14 = arith.constant 0.000000e+00 : f32
    %49 = vector.broadcast %41 : f32 to vector<1x8x128xf32>
    %50 = vector.broadcast %cst_14 : f32 to vector<1x8x128xf32>
    %51 = arith.select %48, %49, %50 : vector<1x8x128xi1>, vector<1x8x128xf32>
    %c0_15 = arith.constant 0 : index
    %c0_16 = arith.constant 0 : index
    %c0_17 = arith.constant 0 : index
    %52 = vector.load %arg3[%c0_15, %c0_16, %c0_17] : memref<1x8x128xf32, #tpu.memory_space<vmem>>, vector<1x8x128xf32>
    tpu.vector_store %arg3[%c0_15, %c0_16, %c0_17], %51 {strides = array<i32>} : memref<1x8x128xf32, #tpu.memory_space<vmem>>, vector<1x8x128xf32>,
    return
  }
  func.func @transform_0(%arg0: i32) -> (i32, i32) {
    %c0_i32 = arith.constant 0 : i32
    %c0_i32_0 = arith.constant 0 : i32
    return %arg0, %c0_i32 : i32, i32
  }
  func.func @transform_1(%arg0: i32) -> (i32, i32) {
    %c0_i32 = arith.constant 0 : i32
    %c0_i32_0 = arith.constant 0 : i32
    return %arg0, %c0_i32 : i32, i32
  }
  func.func @transform_2(%arg0: i32) -> (i32, i32, i32) {
    %c0_i32 = arith.constant 0 : i32
    %c0_i32_0 = arith.constant 0 : i32
    %c0_i32_1 = arith.constant 0 : i32
    return %arg0, %c0_i32, %c0_i32_0 : i32, i32, i32
  }
}

</mosaic_0001>

<llo_original>
// kernel: tpu_custom_call.1
$region0: #{tpu_custom_call.1}
  #allocation0 [shape = 'u32[]', space=smem, size = 0x4, offset = 0x4, fixed_abs, tag = 'smem constant byte address 0x4 - core index']
  #allocation1 [shape = 'u32[72,128]{1,0:T(1,128)}', space=vmem, size = 0x9000, scoped, tag = 'internal scratch']
  %s0 = inlined_call_operand.vmem [shape: f32[16,32], index: 0, kind: input, shape index: {}]
  %s1 = inlined_call_operand.vmem [shape: s32[16,1], index: 1, kind: input, shape index: {}]
  %s2 = inlined_call_operand.hbm [shape: f32[1,8,128], index: 2, kind: output, shape index: {}]
  %s3 = sld [smem:[#allocation0]]
  $region18: #{tpu_custom_call.1} parent=0
    _
  %s5 = ssub.s32 1, %s3
  %s6 = scalar_select 0, %s5, %s3
  $region1: #{tpu_custom_call.1} parent=0
    #allocation2 [shape = 'u8[4096]{0}', space=vmem, size = 0x1000, scoped, tag = 'output window, operand 0, single buffered']
    #allocation3 [shape = 's32[1]{0}', space=sflag, size = 0x4, scoped, tag = 'scoped memory for tpu_custom_call.1']
    %7 = vsyncpa [#allocation3], 0
    // Predicated region
    $region2: #{tpu_custom_call.1} parent=1 // pred_check
      _
    $region3: #{tpu_custom_call.1} parent=1 // pred_check_branch
      %9 = sbr.rel (0) target = $region5
    $region4: #{tpu_custom_call.1} parent=1 // pred_region
      _
    $region5: #{tpu_custom_call.1} parent=1 // pred_fallthru
      _
    // Predicated region
    $region6: #{tpu_custom_call.1} parent=1 // pred_check
      _
    $region7: #{tpu_custom_call.1} parent=1 // pred_check_branch
      %11 = sbr.rel (0) target = $region9
    $region8: #{tpu_custom_call.1} parent=1 // pred_region
      _
    $region9: #{tpu_custom_call.1} parent=1 // pred_fallthru
      _
    %v12 = vld [vmem:[%s0] sm:$0xff]
    %v13 = vld [vmem:[%s0 + $0x8] sm:$0xff]
    %v14 = vld [vmem:[%s1] sm:$0xff]
    %v15 = vld [vmem:[%s1 + $0x8] sm:$0xff]
    %v16 = vlaneseq
    %v17 = vshrl.u32 %v16, 7
    %v18 = vadd.s32 %v17, 8
    %s19 = smul.u32 0, 16
    %v20 = vstv %s19
    %v21 = vadd.s32 %v17, %v20
    %v22 = vadd.s32 %v18, %v20
    %vm23 = vcmp.lt.s32.totalorder %v21, 16
    %vm24 = vcmp.lt.s32.totalorder %v22, 16
    %vm25 = vcmp.ne.s32.totalorder %v14, 0
    %vm26 = vcmp.ne.s32.totalorder %v15, 0
    %vm27 = vmand %vm23, %vm25
    %vm28 = vmand %vm24, %vm26
    %v29 = vlaneseq
    %v30 = vand.u32 %v29, 127
    %31 = vset.pattern.permute.xlu0 0
    %32 = vperm.xlu0 %31, %v14
    %v33 = vpop.permute.xlu0 %32
    %34 = vset.pattern.permute.xlu0 0
    %35 = vperm.xlu0 %34, %v15
    %v36 = vpop.permute.xlu0 %35
    %vm37 = vcmp.eq.s32.totalorder %v30, %v33
    %vm38 = vcmp.eq.s32.totalorder %v30, %v36
    %v39 = vsel %vm37, 0.9, 0.0033333334
    %v40 = vsel %vm38, 0.9, 0.0033333334
    %vm41 = vcmp.eq.s32.totalorder %v30, 0
    %v42 = vsel %vm41, 0.0, %v39
    %v43 = vsel %vm41, 0.0, %v40
    %v44 = vsel %vm27, 1, 0
    %v45 = vsel %vm28, 1, 0
    %46 = vset.pattern.permute.xlu0 0
    %47 = vperm.xlu0 %46, %v44
    %v48 = vpop.permute.xlu0 %47
    %49 = vset.pattern.permute.xlu0 0
    %50 = vperm.xlu0 %49, %v45
    %v51 = vpop.permute.xlu0 %50
    %vm52 = vcmp.eq.s32.totalorder %v48, 1
    %vm53 = vcmp.eq.s32.totalorder %v51, 1
    %v54 = vsel %vm52, %v42, 0.0
    %v55 = vsel %vm53, %v43, 0.0
    %v56 = vsel %vm23, 1, 0
    %v57 = vsel %vm24, 1, 0
    %vm58 = vcmp.eq.s32.totalorder %v56, 1
    %vm59 = vcmp.eq.s32.totalorder %v57, 1
    %v60 = vsel %vm58, %v12, 0.0
    %v61 = vsel %vm59, %v13, 0.0
    %v62 = vcvt.s32.f32 %v44
    %v63 = vcvt.s32.f32 %v45
    %vm64 = vcmask 7168
    %v65 = vsel %vm64, %v62, 0.0
    %v66 = vsel %vm64, %v63, 0.0
    %v67 = vadd.f32 %v65, %v66
    %68 = vadd.xlane.f32.xlu0 %v67
    %v69 = vpop.xlane.xlu0 %68
    %v70 = vrot.slane %v69, 4
    %v71 = vadd.f32 %v69, %v70
    %v72 = vrot.slane %v71, 2
    %v73 = vadd.f32 %v71, %v72
    %v74 = vrot.slane %v73, 1
    %v75 = vadd.f32 %v73, %v74
    %s76 = vtos %v75
    %v77 = vmul.f32 %v54, %v60
    %v78 = vmul.f32 %v55, %v61
    %vm79 = vcmask 261120
    %v80 = vsel %vm79, %v77, 0.0
    %v81 = vsel %vm79, %v78, 0.0
    %v82 = vadd.f32 %v80, %v81
    %83 = vadd.xlane.f32.xlu0 %v82
    %v84 = vpop.xlane.xlu0 %83
    %v85 = vrot.slane %v84, 4
    %v86 = vadd.f32 %v84, %v85
    %v87 = vrot.slane %v86, 2
    %v88 = vadd.f32 %v86, %v87
    %v89 = vrot.slane %v88, 1
    %v90 = vadd.f32 %v88, %v89
    %s91 = vtos %v90
    %s92 = smul.f32 %s76, -0.66520274
    %s93 = ssub.f32 %s92, %s91
    %vm94 = vcmp.eq.s32.totalorder %v17, 0
    %vm95 = vmand %vm94, %vm41
    %v96 = vstv %s93
    %v97 = vsel %vm95, %v96, 0.0
    %98 = vst [vmem:[#allocation2] sm:$0xff] %v97
    // Predicated region
    $region10: #{tpu_custom_call.1} parent=1 // pred_check
      _
    $region11: #{tpu_custom_call.1} parent=1 // pred_check_branch
      %100 = sbr.rel (0) target = $region13
    $region12: #{tpu_custom_call.1} parent=1 // pred_region
      %102 = vsyncadd [#allocation3], 0
      %s104 = sshll.u32 [#allocation2], 4
      %s105 = int_to_ptr.vmem [resolvable:$true] %s104
      %s106 = sshll.u32 %s2, 4
      %s107 = int_to_ptr.hbm [resolvable:$true] %s106
      %109 = dma.vmem_to_hbm [thread:$0]  %s105, 128, %s107, [#allocation3]
    $region13: #{tpu_custom_call.1} parent=1 // pred_fallthru
      _
    // Predicated region
    $region14: #{tpu_custom_call.1} parent=1 // pred_check
      _
    $region15: #{tpu_custom_call.1} parent=1 // pred_check_branch
      %111 = sbr.rel (0) target = $region17
    $region16: #{tpu_custom_call.1} parent=1 // pred_region
      %113 = dma.done [#allocation3], 128
    $region17: #{tpu_custom_call.1} parent=1 // pred_fallthru
      _
    %114 = vsyncpa [#allocation3], 1

</llo_original>
